<compile_context>
chip_gen: v5e
topology: v5e:2x2
jax: 0.10.0
libtpu: 0.0.40
codegen_flags: <defaults>
</compile_context>

<pallas_src>
import jax
import jax.numpy as jnp
from jax import lax
from jax.experimental import pallas as pl
from jax.experimental.pallas import tpu as pltpu

EPS = 1e-5
# Multiple of 8; 196 rows -> grid=(2,), last block ragged (92 valid rows).
BLOCK_ROWS = 104


def layernorm_kernel(x_ref, w_ref, b_ref, o_ref):
    # x_ref: (BLOCK_ROWS, D) tile in VMEM; w_ref/b_ref: (1, D) resident tiles.
    x = x_ref[...].astype(jnp.float32)
    inv_d = 1.0 / x.shape[-1]
    # One-pass statistics: both row reductions issued from the same loaded tile.
    mean = jnp.sum(x, axis=-1, keepdims=True) * inv_d
    mean_sq = jnp.sum(x * x, axis=-1, keepdims=True) * inv_d
    var = jnp.maximum(mean_sq - mean * mean, 0.0)
    inv = lax.rsqrt(var + EPS)
    w = w_ref[...].astype(jnp.float32)
    b = b_ref[...].astype(jnp.float32)
    o_ref[...] = ((x - mean) * inv * w + b).astype(o_ref.dtype)


def layernorm_pallas(x, weight, bias):
    """x: (..., D) array; weight/bias: (D,). LayerNorm over the last dim."""
    orig_shape = x.shape
    D = orig_shape[-1]
    rows = 1
    for s in orig_shape[:-1]:
        rows *= s

    x2 = x.reshape(rows, D)          # free reshape (contiguous)
    w2 = weight.reshape(1, D)
    b2 = bias.reshape(1, D)

    # If rows <= BLOCK_ROWS the block equals the full array dim (divisibility
    # rule waived); otherwise BLOCK_ROWS is a multiple of 8 and the last block
    # is ragged (Pallas masks OOB rows on writeback).
    block_rows = min(BLOCK_ROWS, rows)
    num_blocks = pl.cdiv(rows, block_rows)

    cost = pl.CostEstimate(
        flops=8 * rows * D,
        transcendentals=rows,
        bytes_accessed=2 * rows * D * x.dtype.itemsize
        + 2 * D * weight.dtype.itemsize,
    )

    out = pl.pallas_call(
        layernorm_kernel,
        out_shape=jax.ShapeDtypeStruct((rows, D), x.dtype),
        grid_spec=pltpu.PrefetchScalarGridSpec(
            num_scalar_prefetch=0,
            grid=(num_blocks,),
            in_specs=[
                pl.BlockSpec((block_rows, D), lambda i: (i, 0)),
                pl.BlockSpec((1, D), lambda i: (0, 0)),  # weight stays resident
                pl.BlockSpec((1, D), lambda i: (0, 0)),  # bias stays resident
            ],
            out_specs=pl.BlockSpec((block_rows, D), lambda i: (i, 0)),
        ),
        compiler_params=pltpu.CompilerParams(
            dimension_semantics=("parallel",),  # shards blocks across TCs on v7x
        ),
        cost_estimate=cost,
    )(x2, w2, b2)

    return out.reshape(orig_shape)


if __name__ == "__main__":
    key = jax.random.PRNGKey(0)
    kx, kw, kb = jax.random.split(key, 3)

    # Input shape matching the module: (1, 14, 14, 1024)
    x = jax.random.normal(kx, (1, 14, 14, 1024), dtype=jnp.float32)

    # PyTorch default init is weight=1, bias=0; perturb slightly so the
    # affine path is exercised.
    weight = jnp.ones((1024,), dtype=jnp.float32) + 0.01 * jax.random.normal(
        kw, (1024,), dtype=jnp.float32
    )
    bias = 0.01 * jax.random.normal(kb, (1024,), dtype=jnp.float32)

    out = layernorm_pallas(x, weight, bias)
    out = jax.block_until_ready(out)

    # Sanity check against a plain JAX (two-pass) reference.
    mean = jnp.mean(x, axis=-1, keepdims=True)
    var = jnp.mean((x - mean) ** 2, axis=-1, keepdims=True)
    ref = (x - mean) * lax.rsqrt(var + EPS) * weight + bias
    assert jnp.max(jnp.abs(out - ref)) < 1e-4, "mismatch vs reference"

    print("KERNEL_OK")
</pallas_src>

<mosaic_0001>
module attributes {stable_mosaic.version = 11 : i64} {
  func.func @layernorm_kernel(%arg0: i32, %arg1: memref<104x1024xf32, #tpu.memory_space<vmem>>, %arg2: memref<1x1024xf32, #tpu.memory_space<vmem>>, %arg3: memref<1x1024xf32, #tpu.memory_space<vmem>>, %arg4: memref<104x1024xf32, #tpu.memory_space<vmem>>) attributes {dimension_semantics = [#tpu.dimension_semantics<parallel>], iteration_bounds = array<i64: 2>, scalar_prefetch = 0 : i64, scratch_operands = 0 : i64, tpu.core_type = #tpu.core_type<tc>, window_params = [{transform_indices = @transform_0, window_bounds = array<i64: 104, 1024>}, {pipeline_mode = #tpu.pipeline_mode<synchronous>, transform_indices = @transform_1, window_bounds = array<i64: 1, 1024>}, {pipeline_mode = #tpu.pipeline_mode<synchronous>, transform_indices = @transform_2, window_bounds = array<i64: 1, 1024>}, {transform_indices = @transform_3, window_bounds = array<i64: 104, 1024>}]} {
    %c0 = arith.constant 0 : index
    %c0_0 = arith.constant 0 : index
    %0 = vector.load %arg1[%c0, %c0_0] : memref<104x1024xf32, #tpu.memory_space<vmem>>, vector<104x1024xf32>
    %cst = arith.constant dense<0.000000e+00> : vector<104xf32>
    %1 = vector.multi_reduction <add>, %0, %cst [1] : vector<104x1024xf32> to vector<104xf32>
    %2 = vector.shape_cast %1 : vector<104xf32> to vector<104x1xf32>
    %cst_1 = arith.constant 9.765625E-4 : f32
    %3 = vector.broadcast %cst_1 : f32 to vector<104x1xf32>
    %4 = arith.mulf %2, %3 : vector<104x1xf32>
    %5 = arith.mulf %0, %0 : vector<104x1024xf32>
    %cst_2 = arith.constant dense<0.000000e+00> : vector<104xf32>
    %6 = vector.multi_reduction <add>, %5, %cst_2 [1] : vector<104x1024xf32> to vector<104xf32>
    %7 = vector.shape_cast %6 : vector<104xf32> to vector<104x1xf32>
    %cst_3 = arith.constant 9.765625E-4 : f32
    %8 = vector.broadcast %cst_3 : f32 to vector<104x1xf32>
    %9 = arith.mulf %7, %8 : vector<104x1xf32>
    %10 = arith.mulf %4, %4 : vector<104x1xf32>
    %11 = arith.subf %9, %10 : vector<104x1xf32>
    %cst_4 = arith.constant 0.000000e+00 : f32
    %12 = vector.broadcast %cst_4 : f32 to vector<104x1xf32>
    %13 = arith.maximumf %11, %12 : vector<104x1xf32>
    %cst_5 = arith.constant 9.99999974E-6 : f32
    %14 = vector.broadcast %cst_5 : f32 to vector<104x1xf32>
    %15 = arith.addf %13, %14 : vector<104x1xf32>
    %16 = math.rsqrt %15 : vector<104x1xf32>
    %c0_6 = arith.constant 0 : index
    %c0_7 = arith.constant 0 : index
    %17 = vector.load %arg2[%c0_6, %c0_7] : memref<1x1024xf32, #tpu.memory_space<vmem>>, vector<1x1024xf32>
    %c0_8 = arith.constant 0 : index
    %c0_9 = arith.constant 0 : index
    %18 = vector.load %arg3[%c0_8, %c0_9] : memref<1x1024xf32, #tpu.memory_space<vmem>>, vector<1x1024xf32>
    %19 = vector.broadcast %4 : vector<104x1xf32> to vector<104x1024xf32>
    %20 = arith.subf %0, %19 : vector<104x1024xf32>
    %21 = vector.broadcast %16 : vector<104x1xf32> to vector<104x1024xf32>
    %22 = arith.mulf %20, %21 : vector<104x1024xf32>
    %23 = vector.broadcast %17 : vector<1x1024xf32> to vector<104x1024xf32>
    %24 = arith.mulf %22, %23 : vector<104x1024xf32>
    %25 = vector.broadcast %18 : vector<1x1024xf32> to vector<104x1024xf32>
    %26 = arith.addf %24, %25 : vector<104x1024xf32>
    %c0_10 = arith.constant 0 : index
    %c0_11 = arith.constant 0 : index
    %27 = vector.load %arg4[%c0_10, %c0_11] : memref<104x1024xf32, #tpu.memory_space<vmem>>, vector<104x1024xf32>
    tpu.vector_store %arg4[%c0_10, %c0_11], %26 {strides = array<i32>} : memref<104x1024xf32, #tpu.memory_space<vmem>>, vector<104x1024xf32>,
    return
  }
  func.func @transform_0(%arg0: i32) -> (i32, i32) {
    %c0_i32 = arith.constant 0 : i32
    %c0_i32_0 = arith.constant 0 : i32
    return %arg0, %c0_i32 : i32, i32
  }
  func.func @transform_1(%arg0: i32) -> (i32, i32) {
    %c0_i32 = arith.constant 0 : i32
    %c0_i32_0 = arith.constant 0 : i32
    %c0_i32_1 = arith.constant 0 : i32
    return %c0_i32, %c0_i32_0 : i32, i32
  }
  func.func @transform_2(%arg0: i32) -> (i32, i32) {
    %c0_i32 = arith.constant 0 : i32
    %c0_i32_0 = arith.constant 0 : i32
    %c0_i32_1 = arith.constant 0 : i32
    return %c0_i32, %c0_i32_0 : i32, i32
  }
  func.func @transform_3(%arg0: i32) -> (i32, i32) {
    %c0_i32 = arith.constant 0 : i32
    %c0_i32_0 = arith.constant 0 : i32
    return %arg0, %c0_i32 : i32, i32
  }
}

</mosaic_0001>

<llo_original>
// kernel: tpu_custom_call.1
$region0: #{tpu_custom_call.1}
  #allocation0 [shape = 'u32[]', space=smem, size = 0x4, offset = 0x4, fixed_abs, tag = 'smem constant byte address 0x4 - core index']
  #allocation1 [shape = 'u32[72,128]{1,0:T(1,128)}', space=vmem, size = 0x9000, scoped, tag = 'internal scratch']
  %s0 = inlined_call_operand.hbm [shape: f32[196,1024], index: 0, kind: input, shape index: {}]
  %s1 = inlined_call_operand.hbm [shape: f32[1,1024], index: 1, kind: input, shape index: {}]
  %s2 = inlined_call_operand.hbm [shape: f32[1,1024], index: 2, kind: input, shape index: {}]
  %s3 = inlined_call_operand.hbm [shape: f32[196,1024], index: 3, kind: output, shape index: {}]
  %s4 = sld [smem:[#allocation0]]
  $region57: #{tpu_custom_call.1} parent=0
    _
  %s6 = ssub.s32 1, %s4
  %s7 = scalar_select 0, %s6, %s4
  $region1: #{tpu_custom_call.1} parent=0
    #allocation2 [shape = 'u8[851968]{0}', space=vmem, size = 0xd0000, scoped, tag = 'input window, operand 0']
    #allocation3 [shape = 's32[2]{0}', space=sflag, size = 0x8, scoped, tag = 'scoped memory for tpu_custom_call.1']
    #allocation4 [shape = 's32[2]{0}', space=sflag, size = 0x8, scoped, tag = 'scoped memory for tpu_custom_call.1']
    #allocation5 [shape = 'u8[4096]{0}', space=vmem, size = 0x1000, scoped, tag = 'input window, operand 1, single buffered']
    #allocation6 [shape = 's32[1]{0}', space=sflag, size = 0x4, scoped, tag = 'scoped memory for tpu_custom_call.1']
    #allocation7 [shape = 'u8[4096]{0}', space=vmem, size = 0x1000, scoped, tag = 'input window, operand 2, single buffered']
    #allocation8 [shape = 'u8[851968]{0}', space=vmem, size = 0xd0000, scoped, tag = 'output window, operand 0']
    %8 = vsyncpa [#allocation3], 0
    %s9 = scalar_lea.sflag [#allocation3], 1
    %10 = vsyncpa %s9, 0
    %11 = vsyncpa [#allocation6], 0
    %12 = vsyncpa [#allocation4], 0
    %s13 = scalar_lea.sflag [#allocation4], 1
    %14 = vsyncpa %s13, 0
    loop: start=0, step=1, limit=4
    $region2: #{tpu_custom_call.1} parent=1 // loop_pre_header
      _
    $region3: #{tpu_custom_call.1} parent=1 // loop_header
      %s16 = sphi 0, %s20
      %p17 = scmp.ge.s32.totalorder %s16, 4
      %s26 = sphi 0, %s28
      %s29 = sphi 0, %s26
      %s30 = sphi 0, %s29
      %s46 = sphi 0, %s30
      %s50 = sphi 0, %s50
      %s52 = sphi 0, %s50
      %s53 = sphi 0, %s52
      %s67 = sphi 0, %s53
      %s71 = sphi 0, %s71
      %s73 = sphi 0, %s71
      %s74 = sphi 0, %s73
      %s88 = sphi 0, %s74
      %s94 = sphi 0, %s96
      %s97 = sphi 0, %s94
      %s98 = sphi 0, %s97
      %s114 = sphi 0, %s98
    $region4: #{tpu_custom_call.1} parent=1 // loop_header_branch
      %19 = sbr.rel (%p17) target = $region8
    $region5: #{tpu_custom_call.1} parent=1 // loop_body
      %s21 = ssub.s32 %s16, 1
      %s22 = ssub.s32 %s16, 2
      %s23 = sadd.s32 %s16, 1
      %s24 = ssub.s32 %s16, %s23
      %p25 = scmp.eq.s32.totalorder %s24, 0
      %s27 = sadd.s32 %s26, 1
      %s28 = scalar_select %p25, %s26, %s27
      %p31 = pneg %p25
      %p32 = scmp.eq.s32.totalorder %s16, 1
      %p33 = por %p31, %p32
      %p34 = scmp.ne.s32.totalorder %s26, %s29
      %p35 = scmp.eq.s32.totalorder %s16, 0
      %p36 = por %p34, %p35
      %p37 = scmp.ne.s32.totalorder %s26, %s29
      %p38 = scmp.eq.s32.totalorder %s21, 1
      %p39 = por %p37, %p38
      %p40 = scmp.ne.s32.totalorder %s29, %s30
      %p41 = scmp.eq.s32.totalorder %s21, 0
      %p42 = por %p40, %p41
      %p43 = scmp.ne.s32.totalorder %s29, %s30
      %p44 = scmp.eq.s32.totalorder %s22, 1
      %p45 = por %p43, %p44
      %p47 = scmp.ne.s32.totalorder %s30, %s46
      %p48 = scmp.eq.s32.totalorder %s22, 0
      %p49 = por %p47, %p48
      %s51 = sadd.s32 %s50, 1
      %p54 = scmp.eq.s32.totalorder %s16, 1
      %p55 = scmp.ne.s32.totalorder %s50, %s52
      %p56 = scmp.eq.s32.totalorder %s16, 0
      %p57 = por %p55, %p56
      %p58 = scmp.ne.s32.totalorder %s50, %s52
      %p59 = scmp.eq.s32.totalorder %s21, 1
      %p60 = por %p58, %p59
      %p61 = scmp.ne.s32.totalorder %s52, %s53
      %p62 = scmp.eq.s32.totalorder %s21, 0
      %p63 = por %p61, %p62
      %p64 = scmp.ne.s32.totalorder %s52, %s53
      %p65 = scmp.eq.s32.totalorder %s22, 1
      %p66 = por %p64, %p65
      %p68 = scmp.ne.s32.totalorder %s53, %s67
      %p69 = scmp.eq.s32.totalorder %s22, 0
      %p70 = por %p68, %p69
      %s72 = sadd.s32 %s71, 1
      %p75 = scmp.eq.s32.totalorder %s16, 1
      %p76 = scmp.ne.s32.totalorder %s71, %s73
      %p77 = scmp.eq.s32.totalorder %s16, 0
      %p78 = por %p76, %p77
      %p79 = scmp.ne.s32.totalorder %s71, %s73
      %p80 = scmp.eq.s32.totalorder %s21, 1
      %p81 = por %p79, %p80
      %p82 = scmp.ne.s32.totalorder %s73, %s74
      %p83 = scmp.eq.s32.totalorder %s21, 0
      %p84 = por %p82, %p83
      %p85 = scmp.ne.s32.totalorder %s73, %s74
      %p86 = scmp.eq.s32.totalorder %s22, 1
      %p87 = por %p85, %p86
      %p89 = scmp.ne.s32.totalorder %s74, %s88
      %p90 = scmp.eq.s32.totalorder %s22, 0
      %p91 = por %p89, %p90
      %s92 = ssub.s32 %s16, %s23
      %p93 = scmp.eq.s32.totalorder %s92, 0
      %s95 = sadd.s32 %s94, 1
      %s96 = scalar_select %p93, %s94, %s95
      %p99 = pneg %p93
      %p100 = scmp.eq.s32.totalorder %s16, 1
      %p101 = por %p99, %p100
      %p102 = scmp.ne.s32.totalorder %s94, %s97
      %p103 = scmp.eq.s32.totalorder %s16, 0
      %p104 = por %p102, %p103
      %p105 = scmp.ne.s32.totalorder %s94, %s97
      %p106 = scmp.eq.s32.totalorder %s21, 1
      %p107 = por %p105, %p106
      %p108 = scmp.ne.s32.totalorder %s97, %s98
      %p109 = scmp.eq.s32.totalorder %s21, 0
      %p110 = por %p108, %p109
      %p111 = scmp.ne.s32.totalorder %s97, %s98
      %p112 = scmp.eq.s32.totalorder %s22, 1
      %p113 = por %p111, %p112
      %p115 = scmp.ne.s32.totalorder %s98, %s114
      %p116 = scmp.eq.s32.totalorder %s22, 0
      %p117 = por %p115, %p116
      %p118 = scmp.le.s32.totalorder 1, %s16
      %p119 = scmp.lt.s32.totalorder %s16, 3
      %p120 = pnand %p118, %p119
      %p121 = pneg %p120
      // Predicated region
      $region9: #{tpu_custom_call.1} parent=5 // pred_check
        _
      $region10: #{tpu_custom_call.1} parent=5 // pred_check_branch
        %123 = sbr.rel (%p120) target = $region12
      $region11: #{tpu_custom_call.1} parent=5 // pred_region
        %s124 = ssub.s32 %s16, 1
        // Predicated region
        $region13: #{tpu_custom_call.1} parent=11 // pred_check
          %p125 = pneg %p63
        $region14: #{tpu_custom_call.1} parent=11 // pred_check_branch
          %127 = sbr.rel (%p125) target = $region16
        $region15: #{tpu_custom_call.1} parent=11 // pred_region
          %129 = vsyncadd [#allocation6], 0
          %s131 = sshll.u32 %s1, 4
          %s132 = int_to_ptr.hbm [resolvable:$true] %s131
          %s133 = sshll.u32 [#allocation5], 4
          %s134 = int_to_ptr.vmem [resolvable:$true] %s133
          %136 = dma.hbm_to_vmem [thread:$0]  %s132, 128, %s134, [#allocation6]
        $region16: #{tpu_custom_call.1} parent=11 // pred_fallthru
          _
        // Predicated region
        $region17: #{tpu_custom_call.1} parent=11 // pred_check
          %p137 = pneg %p84
        $region18: #{tpu_custom_call.1} parent=11 // pred_check_branch
          %139 = sbr.rel (%p137) target = $region20
        $region19: #{tpu_custom_call.1} parent=11 // pred_region
          %141 = vsyncadd [#allocation6], 0
          %s143 = sshll.u32 %s2, 4
          %s144 = int_to_ptr.hbm [resolvable:$true] %s143
          %s145 = sshll.u32 [#allocation7], 4
          %s146 = int_to_ptr.vmem [resolvable:$true] %s145
          %148 = dma.hbm_to_vmem [thread:$0]  %s144, 128, %s146, [#allocation6]
        $region20: #{tpu_custom_call.1} parent=11 // pred_fallthru
          _
      $region12: #{tpu_custom_call.1} parent=5 // pred_fallthru
        _
      %p149 = scmp.lt.s32.totalorder %s16, 2
      // Predicated region
      $region21: #{tpu_custom_call.1} parent=5 // pred_check
        %p150 = pneg %p149
      $region22: #{tpu_custom_call.1} parent=5 // pred_check_branch
        %152 = sbr.rel (%p150) target = $region24
      $region23: #{tpu_custom_call.1} parent=5 // pred_region
        // Predicated region
        $region25: #{tpu_custom_call.1} parent=23 // pred_check
          %p153 = pneg %p36
        $region26: #{tpu_custom_call.1} parent=23 // pred_check_branch
          %155 = sbr.rel (%p153) target = $region28
        $region27: #{tpu_custom_call.1} parent=23 // pred_region
          %s156 = sand.u32 %s26, 1
          %s157 = scalar_lea.sflag [#allocation3], %s156
          %s158 = sand.u32 %s26, 1
          %s159 = smul.addr %s158, 832
          %s160 = scalar_lea.vmem [#allocation2], %s159
          %s161 = smul.u32 13, %s16
          %s162 = ssub.s32 25, %s161
          %p163 = scmp.lt.s32.totalorder %s162, 13
          %s164 = scalar_select %p163, %s162, 13
          %s165 = smul.u32 8, %s164
          %s166 = smul.u32 %s165, 8
          %s167 = ssub.s32 832, %s166
          %s168 = sshll.u32 %s167, 4
          %169 = vsyncadd %s157, %s168
          %p170 = scmp.ne.s32.totalorder 0, %s166
          %s171 = smul.addr %s161, 8
          %s172 = smul.addr %s171, 8
          %s173 = scalar_lea.hbm %s0, %s172
          %s174 = smul.u32 64, %s164
          %s175 = sshll.u32 %s173, 4
          %s176 = int_to_ptr.hbm [resolvable:$true] %s175
          %s177 = sshll.u32 %s160, 4
          %s178 = int_to_ptr.vmem [resolvable:$true] %s177
          %s179 = sshll.u32 %s174, 4
          %183 = dma.hbm_to_vmem [thread:$0]  (%p170), %s176, %s179, %s178, %s157, 1024, 1024, 64
        $region28: #{tpu_custom_call.1} parent=23 // pred_fallthru
          _
      $region24: #{tpu_custom_call.1} parent=5 // pred_fallthru
        _
      %p184 = scmp.le.s32.totalorder 1, %s16
      %p185 = scmp.lt.s32.totalorder %s16, 3
      %p186 = pnand %p184, %p185
      %p187 = pneg %p186
      // Predicated region
      $region29: #{tpu_custom_call.1} parent=5 // pred_check
        _
      $region30: #{tpu_custom_call.1} parent=5 // pred_check_branch
        %189 = sbr.rel (%p186) target = $region32
      $region31: #{tpu_custom_call.1} parent=5 // pred_region
        %s190 = ssub.s32 %s16, 1
        %s191 = sand.u32 %s29, 1
        %s192 = scalar_lea.sflag [#allocation3], %s191
        %s193 = sand.u32 %s29, 1
        %s194 = smul.addr %s193, 832
        %s195 = scalar_lea.vmem [#allocation2], %s194
        // Predicated region
        $region33: #{tpu_custom_call.1} parent=31 // pred_check
          %p196 = pneg %p42
        $region34: #{tpu_custom_call.1} parent=31 // pred_check_branch
          %198 = sbr.rel (%p196) target = $region36
        $region35: #{tpu_custom_call.1} parent=31 // pred_region
          %200 = dma.done %s192, 13312
        $region36: #{tpu_custom_call.1} parent=31 // pred_fallthru
          _
        // Predicated region
        $region37: #{tpu_custom_call.1} parent=31 // pred_check
          %p201 = pneg %p63
        $region38: #{tpu_custom_call.1} parent=31 // pred_check_branch
          %203 = sbr.rel (%p201) target = $region40
        $region39: #{tpu_custom_call.1} parent=31 // pred_region
          %205 = dma.done [#allocation6], 128
        $region40: #{tpu_custom_call.1} parent=31 // pred_fallthru
          _
        // Predicated region
        $region41: #{tpu_custom_call.1} parent=31 // pred_check
          %p206 = pneg %p84
        $region42: #{tpu_custom_call.1} parent=31 // pred_check_branch
          %208 = sbr.rel (%p206) target = $region44
        $region43: #{tpu_custom_call.1} parent=31 // pred_region
          %210 = dma.done [#allocation6], 128
        $region44: #{tpu_custom_call.1} parent=31 // pred_fallthru
          _
        %s211 = sand.u32 %s29, 1
        %s212 = scalar_lea.sflag [#allocation3], %s211
        %s213 = sand.u32 %s29, 1
        %s214 = smul.addr %s213, 832
        %s215 = scalar_lea.vmem [#allocation2], %s214
        %p216 = pneg %p42
        %p217 = pneg %p39
        %p218 = pneg %p63
        %p219 = pneg %p60
        %p220 = pneg %p84
        %p221 = pneg %p81
        %p222 = pneg %p110
        %p223 = pneg %p107
        %s224 = sand.u32 %s97, 1
        %s225 = scalar_lea.sflag [#allocation4], %s224
        %s226 = sand.u32 %s97, 1
        %s227 = smul.addr %s226, 832
        %s228 = scalar_lea.vmem [#allocation8], %s227
        %s229 = smul.u32 13, %s21
        %s230 = ssub.s32 25, %s229
        %p231 = scmp.lt.s32.totalorder %s230, 13
        %s232 = scalar_select %p231, %s230, 13
        %s233 = smul.u32 8, %s232
        %s234 = smul.u32 %s233, 8
        %s235 = smul.u32 13, %s21
        %s236 = ssub.s32 25, %s235
        %p237 = scmp.lt.s32.totalorder %s236, 13
        %s238 = scalar_select %p237, %s236, 13
        %s239 = smul.u32 8, %s238
        %s240 = smul.u32 %s239, 8
        %v241 = vld [vmem:[%s195] sm:$0xff]
        %v242 = vld [vmem:[%s195 + $0x8] sm:$0xff]
        %v243 = vld [vmem:[%s195 + $0x10] sm:$0xff]
        %v244 = vld [vmem:[%s195 + $0x18] sm:$0xff]
        %v245 = vld [vmem:[%s195 + $0x20] sm:$0xff]
        %v246 = vld [vmem:[%s195 + $0x28] sm:$0xff]
        %v247 = vld [vmem:[%s195 + $0x30] sm:$0xff]
        %v248 = vld [vmem:[%s195 + $0x38] sm:$0xff]
        %v249 = vld [vmem:[%s195 + $0x40] sm:$0xff]
        %v250 = vld [vmem:[%s195 + $0x48] sm:$0xff]
        %v251 = vld [vmem:[%s195 + $0x50] sm:$0xff]
        %v252 = vld [vmem:[%s195 + $0x58] sm:$0xff]
        %v253 = vld [vmem:[%s195 + $0x60] sm:$0xff]
        %v254 = vld [vmem:[%s195 + $0x68] sm:$0xff]
        %v255 = vld [vmem:[%s195 + $0x70] sm:$0xff]
        %v256 = vld [vmem:[%s195 + $0x78] sm:$0xff]
        %v257 = vld [vmem:[%s195 + $0x80] sm:$0xff]
        %v258 = vld [vmem:[%s195 + $0x88] sm:$0xff]
        %v259 = vld [vmem:[%s195 + $0x90] sm:$0xff]
        %v260 = vld [vmem:[%s195 + $0x98] sm:$0xff]
        %v261 = vld [vmem:[%s195 + $0xa0] sm:$0xff]
        %v262 = vld [vmem:[%s195 + $0xa8] sm:$0xff]
        %v263 = vld [vmem:[%s195 + $0xb0] sm:$0xff]
        %v264 = vld [vmem:[%s195 + $0xb8] sm:$0xff]
        %v265 = vld [vmem:[%s195 + $0xc0] sm:$0xff]
        %v266 = vld [vmem:[%s195 + $0xc8] sm:$0xff]
        %v267 = vld [vmem:[%s195 + $0xd0] sm:$0xff]
        %v268 = vld [vmem:[%s195 + $0xd8] sm:$0xff]
        %v269 = vld [vmem:[%s195 + $0xe0] sm:$0xff]
        %v270 = vld [vmem:[%s195 + $0xe8] sm:$0xff]
        %v271 = vld [vmem:[%s195 + $0xf0] sm:$0xff]
        %v272 = vld [vmem:[%s195 + $0xf8] sm:$0xff]
        %v273 = vld [vmem:[%s195 + $0x100] sm:$0xff]
        %v274 = vld [vmem:[%s195 + $0x108] sm:$0xff]
        %v275 = vld [vmem:[%s195 + $0x110] sm:$0xff]
        %v276 = vld [vmem:[%s195 + $0x118] sm:$0xff]
        %v277 = vld [vmem:[%s195 + $0x120] sm:$0xff]
        %v278 = vld [vmem:[%s195 + $0x128] sm:$0xff]
        %v279 = vld [vmem:[%s195 + $0x130] sm:$0xff]
        %v280 = vld [vmem:[%s195 + $0x138] sm:$0xff]
        %v281 = vld [vmem:[%s195 + $0x140] sm:$0xff]
        %v282 = vld [vmem:[%s195 + $0x148] sm:$0xff]
        %v283 = vld [vmem:[%s195 + $0x150] sm:$0xff]
        %v284 = vld [vmem:[%s195 + $0x158] sm:$0xff]
        %v285 = vld [vmem:[%s195 + $0x160] sm:$0xff]
        %v286 = vld [vmem:[%s195 + $0x168] sm:$0xff]
        %v287 = vld [vmem:[%s195 + $0x170] sm:$0xff]
        %v288 = vld [vmem:[%s195 + $0x178] sm:$0xff]
        %v289 = vld [vmem:[%s195 + $0x180] sm:$0xff]
        %v290 = vld [vmem:[%s195 + $0x188] sm:$0xff]
        %v291 = vld [vmem:[%s195 + $0x190] sm:$0xff]
        %v292 = vld [vmem:[%s195 + $0x198] sm:$0xff]
        %v293 = vld [vmem:[%s195 + $0x1a0] sm:$0xff]
        %v294 = vld [vmem:[%s195 + $0x1a8] sm:$0xff]
        %v295 = vld [vmem:[%s195 + $0x1b0] sm:$0xff]
        %v296 = vld [vmem:[%s195 + $0x1b8] sm:$0xff]
        %v297 = vld [vmem:[%s195 + $0x1c0] sm:$0xff]
        %v298 = vld [vmem:[%s195 + $0x1c8] sm:$0xff]
        %v299 = vld [vmem:[%s195 + $0x1d0] sm:$0xff]
        %v300 = vld [vmem:[%s195 + $0x1d8] sm:$0xff]
        %v301 = vld [vmem:[%s195 + $0x1e0] sm:$0xff]
        %v302 = vld [vmem:[%s195 + $0x1e8] sm:$0xff]
        %v303 = vld [vmem:[%s195 + $0x1f0] sm:$0xff]
        %v304 = vld [vmem:[%s195 + $0x1f8] sm:$0xff]
        %v305 = vld [vmem:[%s195 + $0x200] sm:$0xff]
        %v306 = vld [vmem:[%s195 + $0x208] sm:$0xff]
        %v307 = vld [vmem:[%s195 + $0x210] sm:$0xff]
        %v308 = vld [vmem:[%s195 + $0x218] sm:$0xff]
        %v309 = vld [vmem:[%s195 + $0x220] sm:$0xff]
        %v310 = vld [vmem:[%s195 + $0x228] sm:$0xff]
        %v311 = vld [vmem:[%s195 + $0x230] sm:$0xff]
        %v312 = vld [vmem:[%s195 + $0x238] sm:$0xff]
        %v313 = vld [vmem:[%s195 + $0x240] sm:$0xff]
        %v314 = vld [vmem:[%s195 + $0x248] sm:$0xff]
        %v315 = vld [vmem:[%s195 + $0x250] sm:$0xff]
        %v316 = vld [vmem:[%s195 + $0x258] sm:$0xff]
        %v317 = vld [vmem:[%s195 + $0x260] sm:$0xff]
        %v318 = vld [vmem:[%s195 + $0x268] sm:$0xff]
        %v319 = vld [vmem:[%s195 + $0x270] sm:$0xff]
        %v320 = vld [vmem:[%s195 + $0x278] sm:$0xff]
        %v321 = vld [vmem:[%s195 + $0x280] sm:$0xff]
        %v322 = vld [vmem:[%s195 + $0x288] sm:$0xff]
        %v323 = vld [vmem:[%s195 + $0x290] sm:$0xff]
        %v324 = vld [vmem:[%s195 + $0x298] sm:$0xff]
        %v325 = vld [vmem:[%s195 + $0x2a0] sm:$0xff]
        %v326 = vld [vmem:[%s195 + $0x2a8] sm:$0xff]
        %v327 = vld [vmem:[%s195 + $0x2b0] sm:$0xff]
        %v328 = vld [vmem:[%s195 + $0x2b8] sm:$0xff]
        %v329 = vld [vmem:[%s195 + $0x2c0] sm:$0xff]
        %v330 = vld [vmem:[%s195 + $0x2c8] sm:$0xff]
        %v331 = vld [vmem:[%s195 + $0x2d0] sm:$0xff]
        %v332 = vld [vmem:[%s195 + $0x2d8] sm:$0xff]
        %v333 = vld [vmem:[%s195 + $0x2e0] sm:$0xff]
        %v334 = vld [vmem:[%s195 + $0x2e8] sm:$0xff]
        %v335 = vld [vmem:[%s195 + $0x2f0] sm:$0xff]
        %v336 = vld [vmem:[%s195 + $0x2f8] sm:$0xff]
        %v337 = vld [vmem:[%s195 + $0x300] sm:$0xff]
        %v338 = vld [vmem:[%s195 + $0x308] sm:$0xff]
        %v339 = vld [vmem:[%s195 + $0x310] sm:$0xff]
        %v340 = vld [vmem:[%s195 + $0x318] sm:$0xff]
        %v341 = vld [vmem:[%s195 + $0x320] sm:$0xff]
        %v342 = vld [vmem:[%s195 + $0x328] sm:$0xff]
        %v343 = vld [vmem:[%s195 + $0x330] sm:$0xff]
        %v344 = vld [vmem:[%s195 + $0x338] sm:$0xff]
        %v345 = vadd.f32 %v241, %v242
        %v346 = vadd.f32 %v345, %v243
        %v347 = vadd.f32 %v346, %v244
        %v348 = vadd.f32 %v347, %v245
        %v349 = vadd.f32 %v348, %v246
        %v350 = vadd.f32 %v349, %v247
        %v351 = vadd.f32 %v350, %v248
        %352 = vadd.xlane.f32.xlu0 %v351
        %v353 = vpop.xlane.xlu0 %352
        %v354 = vadd.f32 %v249, %v250
        %v355 = vadd.f32 %v354, %v251
        %v356 = vadd.f32 %v355, %v252
        %v357 = vadd.f32 %v356, %v253
        %v358 = vadd.f32 %v357, %v254
        %v359 = vadd.f32 %v358, %v255
        %v360 = vadd.f32 %v359, %v256
        %361 = vadd.xlane.f32.xlu0 %v360
        %v362 = vpop.xlane.xlu0 %361
        %v363 = vadd.f32 %v257, %v258
        %v364 = vadd.f32 %v363, %v259
        %v365 = vadd.f32 %v364, %v260
        %v366 = vadd.f32 %v365, %v261
        %v367 = vadd.f32 %v366, %v262
        %v368 = vadd.f32 %v367, %v263
        %v369 = vadd.f32 %v368, %v264
        %370 = vadd.xlane.f32.xlu0 %v369
        %v371 = vpop.xlane.xlu0 %370
        %v372 = vadd.f32 %v265, %v266
        %v373 = vadd.f32 %v372, %v267
        %v374 = vadd.f32 %v373, %v268
        %v375 = vadd.f32 %v374, %v269
        %v376 = vadd.f32 %v375, %v270
        %v377 = vadd.f32 %v376, %v271
        %v378 = vadd.f32 %v377, %v272
        %379 = vadd.xlane.f32.xlu0 %v378
        %v380 = vpop.xlane.xlu0 %379
        %v381 = vadd.f32 %v273, %v274
        %v382 = vadd.f32 %v381, %v275
        %v383 = vadd.f32 %v382, %v276
        %v384 = vadd.f32 %v383, %v277
        %v385 = vadd.f32 %v384, %v278
        %v386 = vadd.f32 %v385, %v279
        %v387 = vadd.f32 %v386, %v280
        %388 = vadd.xlane.f32.xlu0 %v387
        %v389 = vpop.xlane.xlu0 %388
        %v390 = vadd.f32 %v281, %v282
        %v391 = vadd.f32 %v390, %v283
        %v392 = vadd.f32 %v391, %v284
        %v393 = vadd.f32 %v392, %v285
        %v394 = vadd.f32 %v393, %v286
        %v395 = vadd.f32 %v394, %v287
        %v396 = vadd.f32 %v395, %v288
        %397 = vadd.xlane.f32.xlu0 %v396
        %v398 = vpop.xlane.xlu0 %397
        %v399 = vadd.f32 %v289, %v290
        %v400 = vadd.f32 %v399, %v291
        %v401 = vadd.f32 %v400, %v292
        %v402 = vadd.f32 %v401, %v293
        %v403 = vadd.f32 %v402, %v294
        %v404 = vadd.f32 %v403, %v295
        %v405 = vadd.f32 %v404, %v296
        %406 = vadd.xlane.f32.xlu0 %v405
        %v407 = vpop.xlane.xlu0 %406
        %v408 = vadd.f32 %v297, %v298
        %v409 = vadd.f32 %v408, %v299
        %v410 = vadd.f32 %v409, %v300
        %v411 = vadd.f32 %v410, %v301
        %v412 = vadd.f32 %v411, %v302
        %v413 = vadd.f32 %v412, %v303
        %v414 = vadd.f32 %v413, %v304
        %415 = vadd.xlane.f32.xlu0 %v414
        %v416 = vpop.xlane.xlu0 %415
        %v417 = vadd.f32 %v305, %v306
        %v418 = vadd.f32 %v417, %v307
        %v419 = vadd.f32 %v418, %v308
        %v420 = vadd.f32 %v419, %v309
        %v421 = vadd.f32 %v420, %v310
        %v422 = vadd.f32 %v421, %v311
        %v423 = vadd.f32 %v422, %v312
        %424 = vadd.xlane.f32.xlu0 %v423
        %v425 = vpop.xlane.xlu0 %424
        %v426 = vadd.f32 %v313, %v314
        %v427 = vadd.f32 %v426, %v315
        %v428 = vadd.f32 %v427, %v316
        %v429 = vadd.f32 %v428, %v317
        %v430 = vadd.f32 %v429, %v318
        %v431 = vadd.f32 %v430, %v319
        %v432 = vadd.f32 %v431, %v320
        %433 = vadd.xlane.f32.xlu0 %v432
        %v434 = vpop.xlane.xlu0 %433
        %v435 = vadd.f32 %v321, %v322
        %v436 = vadd.f32 %v435, %v323
        %v437 = vadd.f32 %v436, %v324
        %v438 = vadd.f32 %v437, %v325
        %v439 = vadd.f32 %v438, %v326
        %v440 = vadd.f32 %v439, %v327
        %v441 = vadd.f32 %v440, %v328
        %442 = vadd.xlane.f32.xlu0 %v441
        %v443 = vpop.xlane.xlu0 %442
        %v444 = vadd.f32 %v329, %v330
        %v445 = vadd.f32 %v444, %v331
        %v446 = vadd.f32 %v445, %v332
        %v447 = vadd.f32 %v446, %v333
        %v448 = vadd.f32 %v447, %v334
        %v449 = vadd.f32 %v448, %v335
        %v450 = vadd.f32 %v449, %v336
        %451 = vadd.xlane.f32.xlu0 %v450
        %v452 = vpop.xlane.xlu0 %451
        %v453 = vadd.f32 %v337, %v338
        %v454 = vadd.f32 %v453, %v339
        %v455 = vadd.f32 %v454, %v340
        %v456 = vadd.f32 %v455, %v341
        %v457 = vadd.f32 %v456, %v342
        %v458 = vadd.f32 %v457, %v343
        %v459 = vadd.f32 %v458, %v344
        %460 = vadd.xlane.f32.xlu0 %v459
        %v461 = vpop.xlane.xlu0 %460
        %v462 = vmul.f32 %v353, 0.0009765625
        %v463 = vmul.f32 %v362, 0.0009765625
        %v464 = vmul.f32 %v371, 0.0009765625
        %v465 = vmul.f32 %v380, 0.0009765625
        %v466 = vmul.f32 %v389, 0.0009765625
        %v467 = vmul.f32 %v398, 0.0009765625
        %v468 = vmul.f32 %v407, 0.0009765625
        %v469 = vmul.f32 %v416, 0.0009765625
        %v470 = vmul.f32 %v425, 0.0009765625
        %v471 = vmul.f32 %v434, 0.0009765625
        %v472 = vmul.f32 %v443, 0.0009765625
        %v473 = vmul.f32 %v452, 0.0009765625
        %v474 = vmul.f32 %v461, 0.0009765625
        %v475 = vmul.f32 %v241, %v241
        %v476 = vmul.f32 %v242, %v242
        %v477 = vmul.f32 %v243, %v243
        %v478 = vmul.f32 %v244, %v244
        %v479 = vmul.f32 %v245, %v245
        %v480 = vmul.f32 %v246, %v246
        %v481 = vmul.f32 %v247, %v247
        %v482 = vmul.f32 %v248, %v248
        %v483 = vmul.f32 %v249, %v249
        %v484 = vmul.f32 %v250, %v250
        %v485 = vmul.f32 %v251, %v251
        %v486 = vmul.f32 %v252, %v252
        %v487 = vmul.f32 %v253, %v253
        %v488 = vmul.f32 %v254, %v254
        %v489 = vmul.f32 %v255, %v255
        %v490 = vmul.f32 %v256, %v256
        %v491 = vmul.f32 %v257, %v257
        %v492 = vmul.f32 %v258, %v258
        %v493 = vmul.f32 %v259, %v259
        %v494 = vmul.f32 %v260, %v260
        %v495 = vmul.f32 %v261, %v261
        %v496 = vmul.f32 %v262, %v262
        %v497 = vmul.f32 %v263, %v263
        %v498 = vmul.f32 %v264, %v264
        %v499 = vmul.f32 %v265, %v265
        %v500 = vmul.f32 %v266, %v266
        %v501 = vmul.f32 %v267, %v267
        %v502 = vmul.f32 %v268, %v268
        %v503 = vmul.f32 %v269, %v269
        %v504 = vmul.f32 %v270, %v270
        %v505 = vmul.f32 %v271, %v271
        %v506 = vmul.f32 %v272, %v272
        %v507 = vmul.f32 %v273, %v273
        %v508 = vmul.f32 %v274, %v274
        %v509 = vmul.f32 %v275, %v275
        %v510 = vmul.f32 %v276, %v276
        %v511 = vmul.f32 %v277, %v277
        %v512 = vmul.f32 %v278, %v278
        %v513 = vmul.f32 %v279, %v279
        %v514 = vmul.f32 %v280, %v280
        %v515 = vmul.f32 %v281, %v281
        %v516 = vmul.f32 %v282, %v282
        %v517 = vmul.f32 %v283, %v283
        %v518 = vmul.f32 %v284, %v284
        %v519 = vmul.f32 %v285, %v285
        %v520 = vmul.f32 %v286, %v286
        %v521 = vmul.f32 %v287, %v287
        %v522 = vmul.f32 %v288, %v288
        %v523 = vmul.f32 %v289, %v289
        %v524 = vmul.f32 %v290, %v290
        %v525 = vmul.f32 %v291, %v291
        %v526 = vmul.f32 %v292, %v292
        %v527 = vmul.f32 %v293, %v293
        %v528 = vmul.f32 %v294, %v294
        %v529 = vmul.f32 %v295, %v295
        %v530 = vmul.f32 %v296, %v296
        %v531 = vmul.f32 %v297, %v297
        %v532 = vmul.f32 %v298, %v298
        %v533 = vmul.f32 %v299, %v299
        %v534 = vmul.f32 %v300, %v300
        %v535 = vmul.f32 %v301, %v301
        %v536 = vmul.f32 %v302, %v302
        %v537 = vmul.f32 %v303, %v303
        %v538 = vmul.f32 %v304, %v304
        %v539 = vmul.f32 %v305, %v305
        %v540 = vmul.f32 %v306, %v306
        %v541 = vmul.f32 %v307, %v307
        %v542 = vmul.f32 %v308, %v308
        %v543 = vmul.f32 %v309, %v309
        %v544 = vmul.f32 %v310, %v310
        %v545 = vmul.f32 %v311, %v311
        %v546 = vmul.f32 %v312, %v312
        %v547 = vmul.f32 %v313, %v313
        %v548 = vmul.f32 %v314, %v314
        %v549 = vmul.f32 %v315, %v315
        %v550 = vmul.f32 %v316, %v316
        %v551 = vmul.f32 %v317, %v317
        %v552 = vmul.f32 %v318, %v318
        %v553 = vmul.f32 %v319, %v319
        %v554 = vmul.f32 %v320, %v320
        %v555 = vmul.f32 %v321, %v321
        %v556 = vmul.f32 %v322, %v322
        %v557 = vmul.f32 %v323, %v323
        %v558 = vmul.f32 %v324, %v324
        %v559 = vmul.f32 %v325, %v325
        %v560 = vmul.f32 %v326, %v326
        %v561 = vmul.f32 %v327, %v327
        %v562 = vmul.f32 %v328, %v328
        %v563 = vmul.f32 %v329, %v329
        %v564 = vmul.f32 %v330, %v330
        %v565 = vmul.f32 %v331, %v331
        %v566 = vmul.f32 %v332, %v332
        %v567 = vmul.f32 %v333, %v333
        %v568 = vmul.f32 %v334, %v334
        %v569 = vmul.f32 %v335, %v335
        %v570 = vmul.f32 %v336, %v336
        %v571 = vmul.f32 %v337, %v337
        %v572 = vmul.f32 %v338, %v338
        %v573 = vmul.f32 %v339, %v339
        %v574 = vmul.f32 %v340, %v340
        %v575 = vmul.f32 %v341, %v341
        %v576 = vmul.f32 %v342, %v342
        %v577 = vmul.f32 %v343, %v343
        %v578 = vmul.f32 %v344, %v344
        %v579 = vadd.f32 %v475, %v476
        %v580 = vadd.f32 %v579, %v477
        %v581 = vadd.f32 %v580, %v478
        %v582 = vadd.f32 %v581, %v479
        %v583 = vadd.f32 %v582, %v480
        %v584 = vadd.f32 %v583, %v481
        %v585 = vadd.f32 %v584, %v482
        %586 = vadd.xlane.f32.xlu0 %v585
        %v587 = vpop.xlane.xlu0 %586
        %v588 = vadd.f32 %v483, %v484
        %v589 = vadd.f32 %v588, %v485
        %v590 = vadd.f32 %v589, %v486
        %v591 = vadd.f32 %v590, %v487
        %v592 = vadd.f32 %v591, %v488
        %v593 = vadd.f32 %v592, %v489
        %v594 = vadd.f32 %v593, %v490
        %595 = vadd.xlane.f32.xlu0 %v594
        %v596 = vpop.xlane.xlu0 %595
        %v597 = vadd.f32 %v491, %v492
        %v598 = vadd.f32 %v597, %v493
        %v599 = vadd.f32 %v598, %v494
        %v600 = vadd.f32 %v599, %v495
        %v601 = vadd.f32 %v600, %v496
        %v602 = vadd.f32 %v601, %v497
        %v603 = vadd.f32 %v602, %v498
        %604 = vadd.xlane.f32.xlu0 %v603
        %v605 = vpop.xlane.xlu0 %604
        %v606 = vadd.f32 %v499, %v500
        %v607 = vadd.f32 %v606, %v501
        %v608 = vadd.f32 %v607, %v502
        %v609 = vadd.f32 %v608, %v503
        %v610 = vadd.f32 %v609, %v504
        %v611 = vadd.f32 %v610, %v505
        %v612 = vadd.f32 %v611, %v506
        %613 = vadd.xlane.f32.xlu0 %v612
        %v614 = vpop.xlane.xlu0 %613
        %v615 = vadd.f32 %v507, %v508
        %v616 = vadd.f32 %v615, %v509
        %v617 = vadd.f32 %v616, %v510
        %v618 = vadd.f32 %v617, %v511
        %v619 = vadd.f32 %v618, %v512
        %v620 = vadd.f32 %v619, %v513
        %v621 = vadd.f32 %v620, %v514
        %622 = vadd.xlane.f32.xlu0 %v621
        %v623 = vpop.xlane.xlu0 %622
        %v624 = vadd.f32 %v515, %v516
        %v625 = vadd.f32 %v624, %v517
        %v626 = vadd.f32 %v625, %v518
        %v627 = vadd.f32 %v626, %v519
        %v628 = vadd.f32 %v627, %v520
        %v629 = vadd.f32 %v628, %v521
        %v630 = vadd.f32 %v629, %v522
        %631 = vadd.xlane.f32.xlu0 %v630
        %v632 = vpop.xlane.xlu0 %631
        %v633 = vadd.f32 %v523, %v524
        %v634 = vadd.f32 %v633, %v525
        %v635 = vadd.f32 %v634, %v526
        %v636 = vadd.f32 %v635, %v527
        %v637 = vadd.f32 %v636, %v528
        %v638 = vadd.f32 %v637, %v529
        %v639 = vadd.f32 %v638, %v530
        %640 = vadd.xlane.f32.xlu0 %v639
        %v641 = vpop.xlane.xlu0 %640
        %v642 = vadd.f32 %v531, %v532
        %v643 = vadd.f32 %v642, %v533
        %v644 = vadd.f32 %v643, %v534
        %v645 = vadd.f32 %v644, %v535
        %v646 = vadd.f32 %v645, %v536
        %v647 = vadd.f32 %v646, %v537
        %v648 = vadd.f32 %v647, %v538
        %649 = vadd.xlane.f32.xlu0 %v648
        %v650 = vpop.xlane.xlu0 %649
        %v651 = vadd.f32 %v539, %v540
        %v652 = vadd.f32 %v651, %v541
        %v653 = vadd.f32 %v652, %v542
        %v654 = vadd.f32 %v653, %v543
        %v655 = vadd.f32 %v654, %v544
        %v656 = vadd.f32 %v655, %v545
        %v657 = vadd.f32 %v656, %v546
        %658 = vadd.xlane.f32.xlu0 %v657
        %v659 = vpop.xlane.xlu0 %658
        %v660 = vadd.f32 %v547, %v548
        %v661 = vadd.f32 %v660, %v549
        %v662 = vadd.f32 %v661, %v550
        %v663 = vadd.f32 %v662, %v551
        %v664 = vadd.f32 %v663, %v552
        %v665 = vadd.f32 %v664, %v553
        %v666 = vadd.f32 %v665, %v554
        %667 = vadd.xlane.f32.xlu0 %v666
        %v668 = vpop.xlane.xlu0 %667
        %v669 = vadd.f32 %v555, %v556
        %v670 = vadd.f32 %v669, %v557
        %v671 = vadd.f32 %v670, %v558
        %v672 = vadd.f32 %v671, %v559
        %v673 = vadd.f32 %v672, %v560
        %v674 = vadd.f32 %v673, %v561
        %v675 = vadd.f32 %v674, %v562
        %676 = vadd.xlane.f32.xlu0 %v675
        %v677 = vpop.xlane.xlu0 %676
        %v678 = vadd.f32 %v563, %v564
        %v679 = vadd.f32 %v678, %v565
        %v680 = vadd.f32 %v679, %v566
        %v681 = vadd.f32 %v680, %v567
        %v682 = vadd.f32 %v681, %v568
        %v683 = vadd.f32 %v682, %v569
        %v684 = vadd.f32 %v683, %v570
        %685 = vadd.xlane.f32.xlu0 %v684
        %v686 = vpop.xlane.xlu0 %685
        %v687 = vadd.f32 %v571, %v572
        %v688 = vadd.f32 %v687, %v573
        %v689 = vadd.f32 %v688, %v574
        %v690 = vadd.f32 %v689, %v575
        %v691 = vadd.f32 %v690, %v576
        %v692 = vadd.f32 %v691, %v577
        %v693 = vadd.f32 %v692, %v578
        %694 = vadd.xlane.f32.xlu0 %v693
        %v695 = vpop.xlane.xlu0 %694
        %v696 = vmul.f32 %v587, 0.0009765625
        %v697 = vmul.f32 %v596, 0.0009765625
        %v698 = vmul.f32 %v605, 0.0009765625
        %v699 = vmul.f32 %v614, 0.0009765625
        %v700 = vmul.f32 %v623, 0.0009765625
        %v701 = vmul.f32 %v632, 0.0009765625
        %v702 = vmul.f32 %v641, 0.0009765625
        %v703 = vmul.f32 %v650, 0.0009765625
        %v704 = vmul.f32 %v659, 0.0009765625
        %v705 = vmul.f32 %v668, 0.0009765625
        %v706 = vmul.f32 %v677, 0.0009765625
        %v707 = vmul.f32 %v686, 0.0009765625
        %v708 = vmul.f32 %v695, 0.0009765625
        %v709 = vmul.f32 %v462, %v462
        %v710 = vmul.f32 %v463, %v463
        %v711 = vmul.f32 %v464, %v464
        %v712 = vmul.f32 %v465, %v465
        %v713 = vmul.f32 %v466, %v466
        %v714 = vmul.f32 %v467, %v467
        %v715 = vmul.f32 %v468, %v468
        %v716 = vmul.f32 %v469, %v469
        %v717 = vmul.f32 %v470, %v470
        %v718 = vmul.f32 %v471, %v471
        %v719 = vmul.f32 %v472, %v472
        %v720 = vmul.f32 %v473, %v473
        %v721 = vmul.f32 %v474, %v474
        %v722 = vsub.f32 %v696, %v709
        %v723 = vsub.f32 %v697, %v710
        %v724 = vsub.f32 %v698, %v711
        %v725 = vsub.f32 %v699, %v712
        %v726 = vsub.f32 %v700, %v713
        %v727 = vsub.f32 %v701, %v714
        %v728 = vsub.f32 %v702, %v715
        %v729 = vsub.f32 %v703, %v716
        %v730 = vsub.f32 %v704, %v717
        %v731 = vsub.f32 %v705, %v718
        %v732 = vsub.f32 %v706, %v719
        %v733 = vsub.f32 %v707, %v720
        %v734 = vsub.f32 %v708, %v721
        %v735 = vmax.f32 %v722, 0.0
        %v736 = vmax.f32 %v723, 0.0
        %v737 = vmax.f32 %v724, 0.0
        %v738 = vmax.f32 %v725, 0.0
        %v739 = vmax.f32 %v726, 0.0
        %v740 = vmax.f32 %v727, 0.0
        %v741 = vmax.f32 %v728, 0.0
        %v742 = vmax.f32 %v729, 0.0
        %v743 = vmax.f32 %v730, 0.0
        %v744 = vmax.f32 %v731, 0.0
        %v745 = vmax.f32 %v732, 0.0
        %v746 = vmax.f32 %v733, 0.0
        %v747 = vmax.f32 %v734, 0.0
        %v748 = vadd.f32 %v735, 1e-05
        %v749 = vadd.f32 %v736, 1e-05
        %v750 = vadd.f32 %v737, 1e-05
        %v751 = vadd.f32 %v738, 1e-05
        %v752 = vadd.f32 %v739, 1e-05
        %v753 = vadd.f32 %v740, 1e-05
        %v754 = vadd.f32 %v741, 1e-05
        %v755 = vadd.f32 %v742, 1e-05
        %v756 = vadd.f32 %v743, 1e-05
        %v757 = vadd.f32 %v744, 1e-05
        %v758 = vadd.f32 %v745, 1e-05
        %v759 = vadd.f32 %v746, 1e-05
        %v760 = vadd.f32 %v747, 1e-05
        %v761 = vrsqrt.pop %v748
        %v762 = vmul.f32 %v761, %v748
        %v763 = vmul.f32 %v762, %v761
        %v764 = vmul.f32 0.5, %v763
        %v765 = vsub.f32 1.5, %v764
        %v766 = vmul.f32 %v761, %v765
        %vm767 = vweird.f32 %v748
        %vm768 = vweird.f32 %v761
        %vm769 = vmor %vm767, %vm768
        %v770 = vsel %vm769, %v761, %v766
        %v771 = vrsqrt.pop %v749
        %v772 = vmul.f32 %v771, %v749
        %v773 = vmul.f32 %v772, %v771
        %v774 = vmul.f32 0.5, %v773
        %v775 = vsub.f32 1.5, %v774
        %v776 = vmul.f32 %v771, %v775
        %vm777 = vweird.f32 %v749
        %vm778 = vweird.f32 %v771
        %vm779 = vmor %vm777, %vm778
        %v780 = vsel %vm779, %v771, %v776
        %v781 = vrsqrt.pop %v750
        %v782 = vmul.f32 %v781, %v750
        %v783 = vmul.f32 %v782, %v781
        %v784 = vmul.f32 0.5, %v783
        %v785 = vsub.f32 1.5, %v784
        %v786 = vmul.f32 %v781, %v785
        %vm787 = vweird.f32 %v750
        %vm788 = vweird.f32 %v781
        %vm789 = vmor %vm787, %vm788
        %v790 = vsel %vm789, %v781, %v786
        %v791 = vrsqrt.pop %v751
        %v792 = vmul.f32 %v791, %v751
        %v793 = vmul.f32 %v792, %v791
        %v794 = vmul.f32 0.5, %v793
        %v795 = vsub.f32 1.5, %v794
        %v796 = vmul.f32 %v791, %v795
        %vm797 = vweird.f32 %v751
        %vm798 = vweird.f32 %v791
        %vm799 = vmor %vm797, %vm798
        %v800 = vsel %vm799, %v791, %v796
        %v801 = vrsqrt.pop %v752
        %v802 = vmul.f32 %v801, %v752
        %v803 = vmul.f32 %v802, %v801
        %v804 = vmul.f32 0.5, %v803
        %v805 = vsub.f32 1.5, %v804
        %v806 = vmul.f32 %v801, %v805
        %vm807 = vweird.f32 %v752
        %vm808 = vweird.f32 %v801
        %vm809 = vmor %vm807, %vm808
        %v810 = vsel %vm809, %v801, %v806
        %v811 = vrsqrt.pop %v753
        %v812 = vmul.f32 %v811, %v753
        %v813 = vmul.f32 %v812, %v811
        %v814 = vmul.f32 0.5, %v813
        %v815 = vsub.f32 1.5, %v814
        %v816 = vmul.f32 %v811, %v815
        %vm817 = vweird.f32 %v753
        %vm818 = vweird.f32 %v811
        %vm819 = vmor %vm817, %vm818
        %v820 = vsel %vm819, %v811, %v816
        %v821 = vrsqrt.pop %v754
        %v822 = vmul.f32 %v821, %v754
        %v823 = vmul.f32 %v822, %v821
        %v824 = vmul.f32 0.5, %v823
        %v825 = vsub.f32 1.5, %v824
        %v826 = vmul.f32 %v821, %v825
        %vm827 = vweird.f32 %v754
        %vm828 = vweird.f32 %v821
        %vm829 = vmor %vm827, %vm828
        %v830 = vsel %vm829, %v821, %v826
        %v831 = vrsqrt.pop %v755
        %v832 = vmul.f32 %v831, %v755
        %v833 = vmul.f32 %v832, %v831
        %v834 = vmul.f32 0.5, %v833
        %v835 = vsub.f32 1.5, %v834
        %v836 = vmul.f32 %v831, %v835
        %vm837 = vweird.f32 %v755
        %vm838 = vweird.f32 %v831
        %vm839 = vmor %vm837, %vm838
        %v840 = vsel %vm839, %v831, %v836
        %v841 = vrsqrt.pop %v756
        %v842 = vmul.f32 %v841, %v756
        %v843 = vmul.f32 %v842, %v841
        %v844 = vmul.f32 0.5, %v843
        %v845 = vsub.f32 1.5, %v844
        %v846 = vmul.f32 %v841, %v845
        %vm847 = vweird.f32 %v756
        %vm848 = vweird.f32 %v841
        %vm849 = vmor %vm847, %vm848
        %v850 = vsel %vm849, %v841, %v846
        %v851 = vrsqrt.pop %v757
        %v852 = vmul.f32 %v851, %v757
        %v853 = vmul.f32 %v852, %v851
        %v854 = vmul.f32 0.5, %v853
        %v855 = vsub.f32 1.5, %v854
        %v856 = vmul.f32 %v851, %v855
        %vm857 = vweird.f32 %v757
        %vm858 = vweird.f32 %v851
        %vm859 = vmor %vm857, %vm858
        %v860 = vsel %vm859, %v851, %v856
        %v861 = vrsqrt.pop %v758
        %v862 = vmul.f32 %v861, %v758
        %v863 = vmul.f32 %v862, %v861
        %v864 = vmul.f32 0.5, %v863
        %v865 = vsub.f32 1.5, %v864
        %v866 = vmul.f32 %v861, %v865
        %vm867 = vweird.f32 %v758
        %vm868 = vweird.f32 %v861
        %vm869 = vmor %vm867, %vm868
        %v870 = vsel %vm869, %v861, %v866
        %v871 = vrsqrt.pop %v759
        %v872 = vmul.f32 %v871, %v759
        %v873 = vmul.f32 %v872, %v871
        %v874 = vmul.f32 0.5, %v873
        %v875 = vsub.f32 1.5, %v874
        %v876 = vmul.f32 %v871, %v875
        %vm877 = vweird.f32 %v759
        %vm878 = vweird.f32 %v871
        %vm879 = vmor %vm877, %vm878
        %v880 = vsel %vm879, %v871, %v876
        %v881 = vrsqrt.pop %v760
        %v882 = vmul.f32 %v881, %v760
        %v883 = vmul.f32 %v882, %v881
        %v884 = vmul.f32 0.5, %v883
        %v885 = vsub.f32 1.5, %v884
        %v886 = vmul.f32 %v881, %v885
        %vm887 = vweird.f32 %v760
        %vm888 = vweird.f32 %v881
        %vm889 = vmor %vm887, %vm888
        %v890 = vsel %vm889, %v881, %v886
        %v891 = vld [vmem:[#allocation5] sm:$0xff]
        %v892 = vld [vmem:[#allocation7] sm:$0xff]
        %v893 = vsub.f32 %v241, %v462
        %v894 = vsub.f32 %v242, %v462
        %v895 = vsub.f32 %v243, %v462
        %v896 = vsub.f32 %v244, %v462
        %v897 = vsub.f32 %v245, %v462
        %v898 = vsub.f32 %v246, %v462
        %v899 = vsub.f32 %v247, %v462
        %v900 = vsub.f32 %v248, %v462
        %v901 = vsub.f32 %v249, %v463
        %v902 = vsub.f32 %v250, %v463
        %v903 = vsub.f32 %v251, %v463
        %v904 = vsub.f32 %v252, %v463
        %v905 = vsub.f32 %v253, %v463
        %v906 = vsub.f32 %v254, %v463
        %v907 = vsub.f32 %v255, %v463
        %v908 = vsub.f32 %v256, %v463
        %v909 = vsub.f32 %v257, %v464
        %v910 = vsub.f32 %v258, %v464
        %v911 = vsub.f32 %v259, %v464
        %v912 = vsub.f32 %v260, %v464
        %v913 = vsub.f32 %v261, %v464
        %v914 = vsub.f32 %v262, %v464
        %v915 = vsub.f32 %v263, %v464
        %v916 = vsub.f32 %v264, %v464
        %v917 = vsub.f32 %v265, %v465
        %v918 = vsub.f32 %v266, %v465
        %v919 = vsub.f32 %v267, %v465
        %v920 = vsub.f32 %v268, %v465
        %v921 = vsub.f32 %v269, %v465
        %v922 = vsub.f32 %v270, %v465
        %v923 = vsub.f32 %v271, %v465
        %v924 = vsub.f32 %v272, %v465
        %v925 = vsub.f32 %v273, %v466
        %v926 = vsub.f32 %v274, %v466
        %v927 = vsub.f32 %v275, %v466
        %v928 = vsub.f32 %v276, %v466
        %v929 = vsub.f32 %v277, %v466
        %v930 = vsub.f32 %v278, %v466
        %v931 = vsub.f32 %v279, %v466
        %v932 = vsub.f32 %v280, %v466
        %v933 = vsub.f32 %v281, %v467
        %v934 = vsub.f32 %v282, %v467
        %v935 = vsub.f32 %v283, %v467
        %v936 = vsub.f32 %v284, %v467
        %v937 = vsub.f32 %v285, %v467
        %v938 = vsub.f32 %v286, %v467
        %v939 = vsub.f32 %v287, %v467
        %v940 = vsub.f32 %v288, %v467
        %v941 = vsub.f32 %v289, %v468
        %v942 = vsub.f32 %v290, %v468
        %v943 = vsub.f32 %v291, %v468
        %v944 = vsub.f32 %v292, %v468
        %v945 = vsub.f32 %v293, %v468
        %v946 = vsub.f32 %v294, %v468
        %v947 = vsub.f32 %v295, %v468
        %v948 = vsub.f32 %v296, %v468
        %v949 = vsub.f32 %v297, %v469
        %v950 = vsub.f32 %v298, %v469
        %v951 = vsub.f32 %v299, %v469
        %v952 = vsub.f32 %v300, %v469
        %v953 = vsub.f32 %v301, %v469
        %v954 = vsub.f32 %v302, %v469
        %v955 = vsub.f32 %v303, %v469
        %v956 = vsub.f32 %v304, %v469
        %v957 = vsub.f32 %v305, %v470
        %v958 = vsub.f32 %v306, %v470
        %v959 = vsub.f32 %v307, %v470
        %v960 = vsub.f32 %v308, %v470
        %v961 = vsub.f32 %v309, %v470
        %v962 = vsub.f32 %v310, %v470
        %v963 = vsub.f32 %v311, %v470
        %v964 = vsub.f32 %v312, %v470
        %v965 = vsub.f32 %v313, %v471
        %v966 = vsub.f32 %v314, %v471
        %v967 = vsub.f32 %v315, %v471
        %v968 = vsub.f32 %v316, %v471
        %v969 = vsub.f32 %v317, %v471
        %v970 = vsub.f32 %v318, %v471
        %v971 = vsub.f32 %v319, %v471
        %v972 = vsub.f32 %v320, %v471
        %v973 = vsub.f32 %v321, %v472
        %v974 = vsub.f32 %v322, %v472
        %v975 = vsub.f32 %v323, %v472
        %v976 = vsub.f32 %v324, %v472
        %v977 = vsub.f32 %v325, %v472
        %v978 = vsub.f32 %v326, %v472
        %v979 = vsub.f32 %v327, %v472
        %v980 = vsub.f32 %v328, %v472
        %v981 = vsub.f32 %v329, %v473
        %v982 = vsub.f32 %v330, %v473
        %v983 = vsub.f32 %v331, %v473
        %v984 = vsub.f32 %v332, %v473
        %v985 = vsub.f32 %v333, %v473
        %v986 = vsub.f32 %v334, %v473
        %v987 = vsub.f32 %v335, %v473
        %v988 = vsub.f32 %v336, %v473
        %v989 = vsub.f32 %v337, %v474
        %v990 = vsub.f32 %v338, %v474
        %v991 = vsub.f32 %v339, %v474
        %v992 = vsub.f32 %v340, %v474
        %v993 = vsub.f32 %v341, %v474
        %v994 = vsub.f32 %v342, %v474
        %v995 = vsub.f32 %v343, %v474
        %v996 = vsub.f32 %v344, %v474
        %v997 = vmul.f32 %v893, %v770
        %v998 = vmul.f32 %v894, %v770
        %v999 = vmul.f32 %v895, %v770
        %v1000 = vmul.f32 %v896, %v770
        %v1001 = vmul.f32 %v897, %v770
        %v1002 = vmul.f32 %v898, %v770
        %v1003 = vmul.f32 %v899, %v770
        %v1004 = vmul.f32 %v900, %v770
        %v1005 = vmul.f32 %v901, %v780
        %v1006 = vmul.f32 %v902, %v780
        %v1007 = vmul.f32 %v903, %v780
        %v1008 = vmul.f32 %v904, %v780
        %v1009 = vmul.f32 %v905, %v780
        %v1010 = vmul.f32 %v906, %v780
        %v1011 = vmul.f32 %v907, %v780
        %v1012 = vmul.f32 %v908, %v780
        %v1013 = vmul.f32 %v909, %v790
        %v1014 = vmul.f32 %v910, %v790
        %v1015 = vmul.f32 %v911, %v790
        %v1016 = vmul.f32 %v912, %v790
        %v1017 = vmul.f32 %v913, %v790
        %v1018 = vmul.f32 %v914, %v790
        %v1019 = vmul.f32 %v915, %v790
        %v1020 = vmul.f32 %v916, %v790
        %v1021 = vmul.f32 %v917, %v800
        %v1022 = vmul.f32 %v918, %v800
        %v1023 = vmul.f32 %v919, %v800
        %v1024 = vmul.f32 %v920, %v800
        %v1025 = vmul.f32 %v921, %v800
        %v1026 = vmul.f32 %v922, %v800
        %v1027 = vmul.f32 %v923, %v800
        %v1028 = vmul.f32 %v924, %v800
        %v1029 = vmul.f32 %v925, %v810
        %v1030 = vmul.f32 %v926, %v810
        %v1031 = vmul.f32 %v927, %v810
        %v1032 = vmul.f32 %v928, %v810
        %v1033 = vmul.f32 %v929, %v810
        %v1034 = vmul.f32 %v930, %v810
        %v1035 = vmul.f32 %v931, %v810
        %v1036 = vmul.f32 %v932, %v810
        %v1037 = vmul.f32 %v933, %v820
        %v1038 = vmul.f32 %v934, %v820
        %v1039 = vmul.f32 %v935, %v820
        %v1040 = vmul.f32 %v936, %v820
        %v1041 = vmul.f32 %v937, %v820
        %v1042 = vmul.f32 %v938, %v820
        %v1043 = vmul.f32 %v939, %v820
        %v1044 = vmul.f32 %v940, %v820
        %v1045 = vmul.f32 %v941, %v830
        %v1046 = vmul.f32 %v942, %v830
        %v1047 = vmul.f32 %v943, %v830
        %v1048 = vmul.f32 %v944, %v830
        %v1049 = vmul.f32 %v945, %v830
        %v1050 = vmul.f32 %v946, %v830
        %v1051 = vmul.f32 %v947, %v830
        %v1052 = vmul.f32 %v948, %v830
        %v1053 = vmul.f32 %v949, %v840
        %v1054 = vmul.f32 %v950, %v840
        %v1055 = vmul.f32 %v951, %v840
        %v1056 = vmul.f32 %v952, %v840
        %v1057 = vmul.f32 %v953, %v840
        %v1058 = vmul.f32 %v954, %v840
        %v1059 = vmul.f32 %v955, %v840
        %v1060 = vmul.f32 %v956, %v840
        %v1061 = vmul.f32 %v957, %v850
        %v1062 = vmul.f32 %v958, %v850
        %v1063 = vmul.f32 %v959, %v850
        %v1064 = vmul.f32 %v960, %v850
        %v1065 = vmul.f32 %v961, %v850
        %v1066 = vmul.f32 %v962, %v850
        %v1067 = vmul.f32 %v963, %v850
        %v1068 = vmul.f32 %v964, %v850
        %v1069 = vmul.f32 %v965, %v860
        %v1070 = vmul.f32 %v966, %v860
        %v1071 = vmul.f32 %v967, %v860
        %v1072 = vmul.f32 %v968, %v860
        %v1073 = vmul.f32 %v969, %v860
        %v1074 = vmul.f32 %v970, %v860
        %v1075 = vmul.f32 %v971, %v860
        %v1076 = vmul.f32 %v972, %v860
        %v1077 = vmul.f32 %v973, %v870
        %v1078 = vmul.f32 %v974, %v870
        %v1079 = vmul.f32 %v975, %v870
        %v1080 = vmul.f32 %v976, %v870
        %v1081 = vmul.f32 %v977, %v870
        %v1082 = vmul.f32 %v978, %v870
        %v1083 = vmul.f32 %v979, %v870
        %v1084 = vmul.f32 %v980, %v870
        %v1085 = vmul.f32 %v981, %v880
        %v1086 = vmul.f32 %v982, %v880
        %v1087 = vmul.f32 %v983, %v880
        %v1088 = vmul.f32 %v984, %v880
        %v1089 = vmul.f32 %v985, %v880
        %v1090 = vmul.f32 %v986, %v880
        %v1091 = vmul.f32 %v987, %v880
        %v1092 = vmul.f32 %v988, %v880
        %v1093 = vmul.f32 %v989, %v890
        %v1094 = vmul.f32 %v990, %v890
        %v1095 = vmul.f32 %v991, %v890
        %v1096 = vmul.f32 %v992, %v890
        %v1097 = vmul.f32 %v993, %v890
        %v1098 = vmul.f32 %v994, %v890
        %v1099 = vmul.f32 %v995, %v890
        %v1100 = vmul.f32 %v996, %v890
        %v1102 = vperm.slane %v891, 0
        %v1103 = vperm.slane %v891, 1
        %v1104 = vperm.slane %v891, 2
        %v1105 = vperm.slane %v891, 3
        %v1106 = vperm.slane %v891, 4
        %v1107 = vperm.slane %v891, 5
        %v1108 = vperm.slane %v891, 6
        %v1109 = vperm.slane %v891, 7
        %v1118 = vmul.f32 %v997, %v1102
        %v1119 = vmul.f32 %v998, %v1103
        %v1120 = vmul.f32 %v999, %v1104
        %v1121 = vmul.f32 %v1000, %v1105
        %v1122 = vmul.f32 %v1001, %v1106
        %v1123 = vmul.f32 %v1002, %v1107
        %v1124 = vmul.f32 %v1003, %v1108
        %v1125 = vmul.f32 %v1004, %v1109
        %v1126 = vmul.f32 %v1005, %v1102
        %v1127 = vmul.f32 %v1006, %v1103
        %v1128 = vmul.f32 %v1007, %v1104
        %v1129 = vmul.f32 %v1008, %v1105
        %v1130 = vmul.f32 %v1009, %v1106
        %v1131 = vmul.f32 %v1010, %v1107
        %v1132 = vmul.f32 %v1011, %v1108
        %v1133 = vmul.f32 %v1012, %v1109
        %v1134 = vmul.f32 %v1013, %v1102
        %v1135 = vmul.f32 %v1014, %v1103
        %v1136 = vmul.f32 %v1015, %v1104
        %v1137 = vmul.f32 %v1016, %v1105
        %v1138 = vmul.f32 %v1017, %v1106
        %v1139 = vmul.f32 %v1018, %v1107
        %v1140 = vmul.f32 %v1019, %v1108
        %v1141 = vmul.f32 %v1020, %v1109
        %v1142 = vmul.f32 %v1021, %v1102
        %v1143 = vmul.f32 %v1022, %v1103
        %v1144 = vmul.f32 %v1023, %v1104
        %v1145 = vmul.f32 %v1024, %v1105
        %v1146 = vmul.f32 %v1025, %v1106
        %v1147 = vmul.f32 %v1026, %v1107
        %v1148 = vmul.f32 %v1027, %v1108
        %v1149 = vmul.f32 %v1028, %v1109
        %v1150 = vmul.f32 %v1029, %v1102
        %v1151 = vmul.f32 %v1030, %v1103
        %v1152 = vmul.f32 %v1031, %v1104
        %v1153 = vmul.f32 %v1032, %v1105
        %v1154 = vmul.f32 %v1033, %v1106
        %v1155 = vmul.f32 %v1034, %v1107
        %v1156 = vmul.f32 %v1035, %v1108
        %v1157 = vmul.f32 %v1036, %v1109
        %v1158 = vmul.f32 %v1037, %v1102
        %v1159 = vmul.f32 %v1038, %v1103
        %v1160 = vmul.f32 %v1039, %v1104
        %v1161 = vmul.f32 %v1040, %v1105
        %v1162 = vmul.f32 %v1041, %v1106
        %v1163 = vmul.f32 %v1042, %v1107
        %v1164 = vmul.f32 %v1043, %v1108
        %v1165 = vmul.f32 %v1044, %v1109
        %v1166 = vmul.f32 %v1045, %v1102
        %v1167 = vmul.f32 %v1046, %v1103
        %v1168 = vmul.f32 %v1047, %v1104
        %v1169 = vmul.f32 %v1048, %v1105
        %v1170 = vmul.f32 %v1049, %v1106
        %v1171 = vmul.f32 %v1050, %v1107
        %v1172 = vmul.f32 %v1051, %v1108
        %v1173 = vmul.f32 %v1052, %v1109
        %v1174 = vmul.f32 %v1053, %v1102
        %v1175 = vmul.f32 %v1054, %v1103
        %v1176 = vmul.f32 %v1055, %v1104
        %v1177 = vmul.f32 %v1056, %v1105
        %v1178 = vmul.f32 %v1057, %v1106
        %v1179 = vmul.f32 %v1058, %v1107
        %v1180 = vmul.f32 %v1059, %v1108
        %v1181 = vmul.f32 %v1060, %v1109
        %v1182 = vmul.f32 %v1061, %v1102
        %v1183 = vmul.f32 %v1062, %v1103
        %v1184 = vmul.f32 %v1063, %v1104
        %v1185 = vmul.f32 %v1064, %v1105
        %v1186 = vmul.f32 %v1065, %v1106
        %v1187 = vmul.f32 %v1066, %v1107
        %v1188 = vmul.f32 %v1067, %v1108
        %v1189 = vmul.f32 %v1068, %v1109
        %v1190 = vmul.f32 %v1069, %v1102
        %v1191 = vmul.f32 %v1070, %v1103
        %v1192 = vmul.f32 %v1071, %v1104
        %v1193 = vmul.f32 %v1072, %v1105
        %v1194 = vmul.f32 %v1073, %v1106
        %v1195 = vmul.f32 %v1074, %v1107
        %v1196 = vmul.f32 %v1075, %v1108
        %v1197 = vmul.f32 %v1076, %v1109
        %v1198 = vmul.f32 %v1077, %v1102
        %v1199 = vmul.f32 %v1078, %v1103
        %v1200 = vmul.f32 %v1079, %v1104
        %v1201 = vmul.f32 %v1080, %v1105
        %v1202 = vmul.f32 %v1081, %v1106
        %v1203 = vmul.f32 %v1082, %v1107
        %v1204 = vmul.f32 %v1083, %v1108
        %v1205 = vmul.f32 %v1084, %v1109
        %v1206 = vmul.f32 %v1085, %v1102
        %v1207 = vmul.f32 %v1086, %v1103
        %v1208 = vmul.f32 %v1087, %v1104
        %v1209 = vmul.f32 %v1088, %v1105
        %v1210 = vmul.f32 %v1089, %v1106
        %v1211 = vmul.f32 %v1090, %v1107
        %v1212 = vmul.f32 %v1091, %v1108
        %v1213 = vmul.f32 %v1092, %v1109
        %v1214 = vmul.f32 %v1093, %v1102
        %v1215 = vmul.f32 %v1094, %v1103
        %v1216 = vmul.f32 %v1095, %v1104
        %v1217 = vmul.f32 %v1096, %v1105
        %v1218 = vmul.f32 %v1097, %v1106
        %v1219 = vmul.f32 %v1098, %v1107
        %v1220 = vmul.f32 %v1099, %v1108
        %v1221 = vmul.f32 %v1100, %v1109
        %v1223 = vperm.slane %v892, 0
        %v1224 = vperm.slane %v892, 1
        %v1225 = vperm.slane %v892, 2
        %v1226 = vperm.slane %v892, 3
        %v1227 = vperm.slane %v892, 4
        %v1228 = vperm.slane %v892, 5
        %v1229 = vperm.slane %v892, 6
        %v1230 = vperm.slane %v892, 7
        %v1239 = vadd.f32 %v1118, %v1223
        %v1240 = vadd.f32 %v1119, %v1224
        %v1241 = vadd.f32 %v1120, %v1225
        %v1242 = vadd.f32 %v1121, %v1226
        %v1243 = vadd.f32 %v1122, %v1227
        %v1244 = vadd.f32 %v1123, %v1228
        %v1245 = vadd.f32 %v1124, %v1229
        %v1246 = vadd.f32 %v1125, %v1230
        %v1247 = vadd.f32 %v1126, %v1223
        %v1248 = vadd.f32 %v1127, %v1224
        %v1249 = vadd.f32 %v1128, %v1225
        %v1250 = vadd.f32 %v1129, %v1226
        %v1251 = vadd.f32 %v1130, %v1227
        %v1252 = vadd.f32 %v1131, %v1228
        %v1253 = vadd.f32 %v1132, %v1229
        %v1254 = vadd.f32 %v1133, %v1230
        %v1255 = vadd.f32 %v1134, %v1223
        %v1256 = vadd.f32 %v1135, %v1224
        %v1257 = vadd.f32 %v1136, %v1225
        %v1258 = vadd.f32 %v1137, %v1226
        %v1259 = vadd.f32 %v1138, %v1227
        %v1260 = vadd.f32 %v1139, %v1228
        %v1261 = vadd.f32 %v1140, %v1229
        %v1262 = vadd.f32 %v1141, %v1230
        %v1263 = vadd.f32 %v1142, %v1223
        %v1264 = vadd.f32 %v1143, %v1224
        %v1265 = vadd.f32 %v1144, %v1225
        %v1266 = vadd.f32 %v1145, %v1226
        %v1267 = vadd.f32 %v1146, %v1227
        %v1268 = vadd.f32 %v1147, %v1228
        %v1269 = vadd.f32 %v1148, %v1229
        %v1270 = vadd.f32 %v1149, %v1230
        %v1271 = vadd.f32 %v1150, %v1223
        %v1272 = vadd.f32 %v1151, %v1224
        %v1273 = vadd.f32 %v1152, %v1225
        %v1274 = vadd.f32 %v1153, %v1226
        %v1275 = vadd.f32 %v1154, %v1227
        %v1276 = vadd.f32 %v1155, %v1228
        %v1277 = vadd.f32 %v1156, %v1229
        %v1278 = vadd.f32 %v1157, %v1230
        %v1279 = vadd.f32 %v1158, %v1223
        %v1280 = vadd.f32 %v1159, %v1224
        %v1281 = vadd.f32 %v1160, %v1225
        %v1282 = vadd.f32 %v1161, %v1226
        %v1283 = vadd.f32 %v1162, %v1227
        %v1284 = vadd.f32 %v1163, %v1228
        %v1285 = vadd.f32 %v1164, %v1229
        %v1286 = vadd.f32 %v1165, %v1230
        %v1287 = vadd.f32 %v1166, %v1223
        %v1288 = vadd.f32 %v1167, %v1224
        %v1289 = vadd.f32 %v1168, %v1225
        %v1290 = vadd.f32 %v1169, %v1226
        %v1291 = vadd.f32 %v1170, %v1227
        %v1292 = vadd.f32 %v1171, %v1228
        %v1293 = vadd.f32 %v1172, %v1229
        %v1294 = vadd.f32 %v1173, %v1230
        %v1295 = vadd.f32 %v1174, %v1223
        %v1296 = vadd.f32 %v1175, %v1224
        %v1297 = vadd.f32 %v1176, %v1225
        %v1298 = vadd.f32 %v1177, %v1226
        %v1299 = vadd.f32 %v1178, %v1227
        %v1300 = vadd.f32 %v1179, %v1228
        %v1301 = vadd.f32 %v1180, %v1229
        %v1302 = vadd.f32 %v1181, %v1230
        %v1303 = vadd.f32 %v1182, %v1223
        %v1304 = vadd.f32 %v1183, %v1224
        %v1305 = vadd.f32 %v1184, %v1225
        %v1306 = vadd.f32 %v1185, %v1226
        %v1307 = vadd.f32 %v1186, %v1227
        %v1308 = vadd.f32 %v1187, %v1228
        %v1309 = vadd.f32 %v1188, %v1229
        %v1310 = vadd.f32 %v1189, %v1230
        %v1311 = vadd.f32 %v1190, %v1223
        %v1312 = vadd.f32 %v1191, %v1224
        %v1313 = vadd.f32 %v1192, %v1225
        %v1314 = vadd.f32 %v1193, %v1226
        %v1315 = vadd.f32 %v1194, %v1227
        %v1316 = vadd.f32 %v1195, %v1228
        %v1317 = vadd.f32 %v1196, %v1229
        %v1318 = vadd.f32 %v1197, %v1230
        %v1319 = vadd.f32 %v1198, %v1223
        %v1320 = vadd.f32 %v1199, %v1224
        %v1321 = vadd.f32 %v1200, %v1225
        %v1322 = vadd.f32 %v1201, %v1226
        %v1323 = vadd.f32 %v1202, %v1227
        %v1324 = vadd.f32 %v1203, %v1228
        %v1325 = vadd.f32 %v1204, %v1229
        %v1326 = vadd.f32 %v1205, %v1230
        %v1327 = vadd.f32 %v1206, %v1223
        %v1328 = vadd.f32 %v1207, %v1224
        %v1329 = vadd.f32 %v1208, %v1225
        %v1330 = vadd.f32 %v1209, %v1226
        %v1331 = vadd.f32 %v1210, %v1227
        %v1332 = vadd.f32 %v1211, %v1228
        %v1333 = vadd.f32 %v1212, %v1229
        %v1334 = vadd.f32 %v1213, %v1230
        %v1335 = vadd.f32 %v1214, %v1223
        %v1336 = vadd.f32 %v1215, %v1224
        %v1337 = vadd.f32 %v1216, %v1225
        %v1338 = vadd.f32 %v1217, %v1226
        %v1339 = vadd.f32 %v1218, %v1227
        %v1340 = vadd.f32 %v1219, %v1228
        %v1341 = vadd.f32 %v1220, %v1229
        %v1342 = vadd.f32 %v1221, %v1230
        %1343 = vst [vmem:[%s228] sm:$0xff] %v1239
        %1344 = vst [vmem:[%s228 + $0x8] sm:$0xff] %v1240
        %1345 = vst [vmem:[%s228 + $0x10] sm:$0xff] %v1241
        %1346 = vst [vmem:[%s228 + $0x18] sm:$0xff] %v1242
        %1347 = vst [vmem:[%s228 + $0x20] sm:$0xff] %v1243
        %1348 = vst [vmem:[%s228 + $0x28] sm:$0xff] %v1244
        %1349 = vst [vmem:[%s228 + $0x30] sm:$0xff] %v1245
        %1350 = vst [vmem:[%s228 + $0x38] sm:$0xff] %v1246
        %1351 = vst [vmem:[%s228 + $0x40] sm:$0xff] %v1247
        %1352 = vst [vmem:[%s228 + $0x48] sm:$0xff] %v1248
        %1353 = vst [vmem:[%s228 + $0x50] sm:$0xff] %v1249
        %1354 = vst [vmem:[%s228 + $0x58] sm:$0xff] %v1250
        %1355 = vst [vmem:[%s228 + $0x60] sm:$0xff] %v1251
        %1356 = vst [vmem:[%s228 + $0x68] sm:$0xff] %v1252
        %1357 = vst [vmem:[%s228 + $0x70] sm:$0xff] %v1253
        %1358 = vst [vmem:[%s228 + $0x78] sm:$0xff] %v1254
        %1359 = vst [vmem:[%s228 + $0x80] sm:$0xff] %v1255
        %1360 = vst [vmem:[%s228 + $0x88] sm:$0xff] %v1256
        %1361 = vst [vmem:[%s228 + $0x90] sm:$0xff] %v1257
        %1362 = vst [vmem:[%s228 + $0x98] sm:$0xff] %v1258
        %1363 = vst [vmem:[%s228 + $0xa0] sm:$0xff] %v1259
        %1364 = vst [vmem:[%s228 + $0xa8] sm:$0xff] %v1260
        %1365 = vst [vmem:[%s228 + $0xb0] sm:$0xff] %v1261
        %1366 = vst [vmem:[%s228 + $0xb8] sm:$0xff] %v1262
        %1367 = vst [vmem:[%s228 + $0xc0] sm:$0xff] %v1263
        %1368 = vst [vmem:[%s228 + $0xc8] sm:$0xff] %v1264
        %1369 = vst [vmem:[%s228 + $0xd0] sm:$0xff] %v1265
        %1370 = vst [vmem:[%s228 + $0xd8] sm:$0xff] %v1266
        %1371 = vst [vmem:[%s228 + $0xe0] sm:$0xff] %v1267
        %1372 = vst [vmem:[%s228 + $0xe8] sm:$0xff] %v1268
        %1373 = vst [vmem:[%s228 + $0xf0] sm:$0xff] %v1269
        %1374 = vst [vmem:[%s228 + $0xf8] sm:$0xff] %v1270
        %1375 = vst [vmem:[%s228 + $0x100] sm:$0xff] %v1271
        %1376 = vst [vmem:[%s228 + $0x108] sm:$0xff] %v1272
        %1377 = vst [vmem:[%s228 + $0x110] sm:$0xff] %v1273
        %1378 = vst [vmem:[%s228 + $0x118] sm:$0xff] %v1274
        %1379 = vst [vmem:[%s228 + $0x120] sm:$0xff] %v1275
        %1380 = vst [vmem:[%s228 + $0x128] sm:$0xff] %v1276
        %1381 = vst [vmem:[%s228 + $0x130] sm:$0xff] %v1277
        %1382 = vst [vmem:[%s228 + $0x138] sm:$0xff] %v1278
        %1383 = vst [vmem:[%s228 + $0x140] sm:$0xff] %v1279
        %1384 = vst [vmem:[%s228 + $0x148] sm:$0xff] %v1280
        %1385 = vst [vmem:[%s228 + $0x150] sm:$0xff] %v1281
        %1386 = vst [vmem:[%s228 + $0x158] sm:$0xff] %v1282
        %1387 = vst [vmem:[%s228 + $0x160] sm:$0xff] %v1283
        %1388 = vst [vmem:[%s228 + $0x168] sm:$0xff] %v1284
        %1389 = vst [vmem:[%s228 + $0x170] sm:$0xff] %v1285
        %1390 = vst [vmem:[%s228 + $0x178] sm:$0xff] %v1286
        %1391 = vst [vmem:[%s228 + $0x180] sm:$0xff] %v1287
        %1392 = vst [vmem:[%s228 + $0x188] sm:$0xff] %v1288
        %1393 = vst [vmem:[%s228 + $0x190] sm:$0xff] %v1289
        %1394 = vst [vmem:[%s228 + $0x198] sm:$0xff] %v1290
        %1395 = vst [vmem:[%s228 + $0x1a0] sm:$0xff] %v1291
        %1396 = vst [vmem:[%s228 + $0x1a8] sm:$0xff] %v1292
        %1397 = vst [vmem:[%s228 + $0x1b0] sm:$0xff] %v1293
        %1398 = vst [vmem:[%s228 + $0x1b8] sm:$0xff] %v1294
        %1399 = vst [vmem:[%s228 + $0x1c0] sm:$0xff] %v1295
        %1400 = vst [vmem:[%s228 + $0x1c8] sm:$0xff] %v1296
        %1401 = vst [vmem:[%s228 + $0x1d0] sm:$0xff] %v1297
        %1402 = vst [vmem:[%s228 + $0x1d8] sm:$0xff] %v1298
        %1403 = vst [vmem:[%s228 + $0x1e0] sm:$0xff] %v1299
        %1404 = vst [vmem:[%s228 + $0x1e8] sm:$0xff] %v1300
        %1405 = vst [vmem:[%s228 + $0x1f0] sm:$0xff] %v1301
        %1406 = vst [vmem:[%s228 + $0x1f8] sm:$0xff] %v1302
        %1407 = vst [vmem:[%s228 + $0x200] sm:$0xff] %v1303
        %1408 = vst [vmem:[%s228 + $0x208] sm:$0xff] %v1304
        %1409 = vst [vmem:[%s228 + $0x210] sm:$0xff] %v1305
        %1410 = vst [vmem:[%s228 + $0x218] sm:$0xff] %v1306
        %1411 = vst [vmem:[%s228 + $0x220] sm:$0xff] %v1307
        %1412 = vst [vmem:[%s228 + $0x228] sm:$0xff] %v1308
        %1413 = vst [vmem:[%s228 + $0x230] sm:$0xff] %v1309
        %1414 = vst [vmem:[%s228 + $0x238] sm:$0xff] %v1310
        %1415 = vst [vmem:[%s228 + $0x240] sm:$0xff] %v1311
        %1416 = vst [vmem:[%s228 + $0x248] sm:$0xff] %v1312
        %1417 = vst [vmem:[%s228 + $0x250] sm:$0xff] %v1313
        %1418 = vst [vmem:[%s228 + $0x258] sm:$0xff] %v1314
        %1419 = vst [vmem:[%s228 + $0x260] sm:$0xff] %v1315
        %1420 = vst [vmem:[%s228 + $0x268] sm:$0xff] %v1316
        %1421 = vst [vmem:[%s228 + $0x270] sm:$0xff] %v1317
        %1422 = vst [vmem:[%s228 + $0x278] sm:$0xff] %v1318
        %1423 = vst [vmem:[%s228 + $0x280] sm:$0xff] %v1319
        %1424 = vst [vmem:[%s228 + $0x288] sm:$0xff] %v1320
        %1425 = vst [vmem:[%s228 + $0x290] sm:$0xff] %v1321
        %1426 = vst [vmem:[%s228 + $0x298] sm:$0xff] %v1322
        %1427 = vst [vmem:[%s228 + $0x2a0] sm:$0xff] %v1323
        %1428 = vst [vmem:[%s228 + $0x2a8] sm:$0xff] %v1324
        %1429 = vst [vmem:[%s228 + $0x2b0] sm:$0xff] %v1325
        %1430 = vst [vmem:[%s228 + $0x2b8] sm:$0xff] %v1326
        %1431 = vst [vmem:[%s228 + $0x2c0] sm:$0xff] %v1327
        %1432 = vst [vmem:[%s228 + $0x2c8] sm:$0xff] %v1328
        %1433 = vst [vmem:[%s228 + $0x2d0] sm:$0xff] %v1329
        %1434 = vst [vmem:[%s228 + $0x2d8] sm:$0xff] %v1330
        %1435 = vst [vmem:[%s228 + $0x2e0] sm:$0xff] %v1331
        %1436 = vst [vmem:[%s228 + $0x2e8] sm:$0xff] %v1332
        %1437 = vst [vmem:[%s228 + $0x2f0] sm:$0xff] %v1333
        %1438 = vst [vmem:[%s228 + $0x2f8] sm:$0xff] %v1334
        %1439 = vst [vmem:[%s228 + $0x300] sm:$0xff] %v1335
        %1440 = vst [vmem:[%s228 + $0x308] sm:$0xff] %v1336
        %1441 = vst [vmem:[%s228 + $0x310] sm:$0xff] %v1337
        %1442 = vst [vmem:[%s228 + $0x318] sm:$0xff] %v1338
        %1443 = vst [vmem:[%s228 + $0x320] sm:$0xff] %v1339
        %1444 = vst [vmem:[%s228 + $0x328] sm:$0xff] %v1340
        %1445 = vst [vmem:[%s228 + $0x330] sm:$0xff] %v1341
        %1446 = vst [vmem:[%s228 + $0x338] sm:$0xff] %v1342
        %s1447 = sand.u32 %s97, 1
        %s1448 = scalar_lea.sflag [#allocation4], %s1447
        %s1449 = sand.u32 %s97, 1
        %s1450 = smul.addr %s1449, 832
        %s1451 = scalar_lea.vmem [#allocation8], %s1450
        // Predicated region
        $region45: #{tpu_custom_call.1} parent=31 // pred_check
          %p1452 = pneg %p107
        $region46: #{tpu_custom_call.1} parent=31 // pred_check_branch
          %1454 = sbr.rel (%p1452) target = $region48
        $region47: #{tpu_custom_call.1} parent=31 // pred_region
          %s1455 = smul.u32 13, %s21
          %s1456 = ssub.s32 25, %s1455
          %p1457 = scmp.lt.s32.totalorder %s1456, 13
          %s1458 = scalar_select %p1457, %s1456, 13
          %s1459 = smul.u32 8, %s1458
          %s1460 = smul.u32 %s1459, 8
          %s1461 = ssub.s32 832, %s1460
          %s1462 = sshll.u32 %s1461, 4
          %1463 = vsyncadd %s1448, %s1462
          %p1464 = scmp.ne.s32.totalorder 0, %s1460
          %s1465 = smul.addr %s1455, 8
          %s1466 = smul.addr %s1465, 8
          %s1467 = scalar_lea.hbm %s3, %s1466
          %s1468 = smul.u32 64, %s1458
          %s1469 = sshll.u32 %s1451, 4
          %s1470 = int_to_ptr.vmem [resolvable:$true] %s1469
          %s1471 = sshll.u32 %s1467, 4
          %s1472 = int_to_ptr.hbm [resolvable:$true] %s1471
          %s1473 = sshll.u32 %s1468, 4
          %1477 = dma.vmem_to_hbm [thread:$0]  (%p1464), %s1470, %s1473, %s1472, %s1448, 1024, 1024, 64
        $region48: #{tpu_custom_call.1} parent=31 // pred_fallthru
          _
      $region32: #{tpu_custom_call.1} parent=5 // pred_fallthru
        _
      %p1478 = scmp.le.s32.totalorder 2, %s16
      // Predicated region
      $region49: #{tpu_custom_call.1} parent=5 // pred_check
        %p1479 = pneg %p1478
      $region50: #{tpu_custom_call.1} parent=5 // pred_check_branch
        %1481 = sbr.rel (%p1479) target = $region52
      $region51: #{tpu_custom_call.1} parent=5 // pred_region
        %s1482 = ssub.s32 %s16, 2
        // Predicated region
        $region53: #{tpu_custom_call.1} parent=51 // pred_check
          %p1483 = pneg %p113
        $region54: #{tpu_custom_call.1} parent=51 // pred_check_branch
          %1485 = sbr.rel (%p1483) target = $region56
        $region55: #{tpu_custom_call.1} parent=51 // pred_region
          %s1486 = sand.u32 %s98, 1
          %s1487 = scalar_lea.sflag [#allocation4], %s1486
          %s1488 = sand.u32 %s98, 1
          %s1489 = smul.addr %s1488, 832
          %s1490 = scalar_lea.vmem [#allocation8], %s1489
          %1492 = dma.done %s1487, 13312
        $region56: #{tpu_custom_call.1} parent=51 // pred_fallthru
          _
      $region52: #{tpu_custom_call.1} parent=5 // pred_fallthru
        _
    $region6: #{tpu_custom_call.1} parent=1 // loop_footer
      %s20 = sadd.s32 1, %s16
    $region7: #{tpu_custom_call.1} parent=1 // loop_footer_branch
      %15 = sbr.rel target = $region3
    $region8: #{tpu_custom_call.1} parent=1 // loop_exit
      _
    %1493 = vsyncpa [#allocation3], 1
    %s1494 = scalar_lea.sflag [#allocation3], 1
    %1495 = vsyncpa %s1494, 1
    %1496 = vsyncpa [#allocation6], 1
    %1497 = vsyncpa [#allocation4], 1
    %s1498 = scalar_lea.sflag [#allocation4], 1
    %1499 = vsyncpa %s1498, 1

</llo_original>
